<compile_context>
chip_gen: v6e
topology: v6e:2x2x1
jax: 0.10.0
libtpu: 0.0.40
codegen_flags: <defaults>
</compile_context>

<pallas_src>
import functools

import jax
import jax.numpy as jnp
from jax.experimental import pallas as pl
from jax.experimental.pallas import tpu as pltpu


def _round_up(x, m):
    return (x + m - 1) // m * m


def generator_kernel(x_ref, w_ref, b_ref, o_ref, m_sc, s_sc):
    # x_ref: (tm, d_model) bf16, w_ref: (d_model, tv) bf16, b_ref: (1, tv) f32
    # o_ref: (tm, tv), m_sc / s_sc: (tm, 1) f32 running max / running sum-exp.
    j = pl.program_id(1)
    n_vt = pl.num_programs(1) // 2  # number of vocab tiles (grid axis = 2*n_vt)

    # MXU matmul, f32 accumulation; bias add on the VPU.
    logits = jnp.dot(x_ref[...], w_ref[...],
                     preferred_element_type=jnp.float32) + b_ref[...]

    @pl.when(j == 0)
    def _init():
        m_sc[...] = jnp.full(m_sc.shape, -jnp.inf, dtype=m_sc.dtype)
        s_sc[...] = jnp.zeros(s_sc.shape, dtype=s_sc.dtype)

    @pl.when(j < n_vt)
    def _accumulate():
        # Online logsumexp accumulation over vocab tiles.
        m_prev = m_sc[...]
        m_new = jnp.maximum(m_prev, jnp.max(logits, axis=-1, keepdims=True))
        s_sc[...] = (s_sc[...] * jnp.exp(m_prev - m_new)
                     + jnp.sum(jnp.exp(logits - m_new), axis=-1, keepdims=True))
        m_sc[...] = m_new

    @pl.when(j == n_vt - 1)
    def _finalize():
        # m_sc becomes the full log-sum-exp for this row tile.
        m_sc[...] = m_sc[...] + jnp.log(s_sc[...])

    @pl.when(j >= n_vt)
    def _emit():
        o_ref[...] = (logits - m_sc[...]).astype(o_ref.dtype)


def generator_forward(x, w, b, *, block_rows=256, block_vocab=1024,
                      compute_dtype=jnp.bfloat16, out_dtype=None):
    """log_softmax(x @ w + b, axis=-1).  x: (..., d_model), w: (d_model, vocab)."""
    orig_shape = x.shape
    d_model = orig_shape[-1]
    vocab = w.shape[-1]
    out_dtype = x.dtype if out_dtype is None else out_dtype

    x2d = x.reshape(-1, d_model)
    n = x2d.shape[0]

    # Row tile: MXU-native size, clamped for tiny inputs (multiple of 8).
    tm = min(block_rows, _round_up(n, 8))
    n_pad = _round_up(n, tm)

    # Vocab tile: lane-aligned (multiple of 128); pad vocab so tiles divide it.
    tv = min(block_vocab, _round_up(vocab, 128))
    v_pad = _round_up(vocab, tv)

    # Cast the large operands to bf16 (f32 accumulation inside the kernel).
    xc = x2d.astype(compute_dtype)
    wc = w.astype(compute_dtype)
    bc = b.astype(jnp.float32)

    if n_pad != n:
        xc = jnp.pad(xc, ((0, n_pad - n), (0, 0)))
    if v_pad != vocab:
        wc = jnp.pad(wc, ((0, 0), (0, v_pad - vocab)))
        # Padded logits get a huge negative bias so they vanish under softmax.
        bc = jnp.pad(bc, (0, v_pad - vocab), constant_values=-1e30)
    b2d = bc.reshape(1, v_pad)

    n_row_tiles = n_pad // tm
    n_vocab_tiles = v_pad // tv

    out = pl.pallas_call(
        generator_kernel,
        out_shape=jax.ShapeDtypeStruct((n_pad, v_pad), out_dtype),
        grid_spec=pltpu.PrefetchScalarGridSpec(
            num_scalar_prefetch=0,
            grid=(n_row_tiles, 2 * n_vocab_tiles),
            in_specs=[
                # x tile is constant over the vocab/pass axis -> fetched once
                # per row tile.
                pl.BlockSpec((tm, d_model), lambda i, j: (i, 0)),
                # Weight / bias slabs cycle over vocab tiles in both passes.
                pl.BlockSpec((d_model, tv),
                             lambda i, j: (0, j % n_vocab_tiles)),
                pl.BlockSpec((1, tv),
                             lambda i, j: (0, j % n_vocab_tiles)),
            ],
            out_specs=pl.BlockSpec(
                (tm, tv),
                lambda i, j: (i, jnp.maximum(j - n_vocab_tiles, 0))),
            scratch_shapes=[
                pltpu.VMEM((tm, 1), jnp.float32),  # running max / final lse
                pltpu.VMEM((tm, 1), jnp.float32),  # running sum of exp
            ],
        ),
        compiler_params=pltpu.CompilerParams(
            dimension_semantics=("parallel", "arbitrary"),
            vmem_limit_bytes=48 * 1024 * 1024,
        ),
    )(xc, wc, b2d)

    out = out[:n, :vocab]
    return out.reshape(*orig_shape[:-1], vocab)


def _reference_bf16(x, w, b):
    # Reference with the same bf16 input rounding (f32 math downstream).
    xf = x.astype(jnp.bfloat16).astype(jnp.float32)
    wf = w.astype(jnp.bfloat16).astype(jnp.float32)
    return jax.nn.log_softmax(xf @ wf + b.astype(jnp.float32), axis=-1)


if __name__ == "__main__":
    # Small shapes consistent with the module: batch=2, seq=8, d_model=32, vocab=128
    batch, seq, d_model, vocab = 2, 8, 32, 128

    key = jax.random.PRNGKey(0)
    kx, kw, kb, kx2, kw2, kb2 = jax.random.split(key, 6)

    x = jax.random.normal(kx, (batch, seq, d_model), dtype=jnp.float32)
    w = jax.random.normal(kw, (d_model, vocab), dtype=jnp.float32) * (1.0 / d_model ** 0.5)
    b = jax.random.normal(kb, (vocab,), dtype=jnp.float32) * 0.01

    out = jax.block_until_ready(generator_forward(x, w, b))
    assert out.shape == (batch, seq, vocab)

    ref = _reference_bf16(x, w, b)
    assert jnp.allclose(out, ref, atol=5e-3, rtol=5e-3), "mismatch vs reference"
    # Softmax normalization check (independent of the bf16 input cast).
    assert jnp.allclose(jnp.sum(jnp.exp(out), axis=-1), 1.0, atol=1e-3)

    # Second case exercising row padding (15 rows) and vocab padding (100 -> 128).
    d2, v2 = 32, 100
    x2 = jax.random.normal(kx2, (3, 5, d2), dtype=jnp.float32)
    w2 = jax.random.normal(kw2, (d2, v2), dtype=jnp.float32) * (1.0 / d2 ** 0.5)
    b2 = jax.random.normal(kb2, (v2,), dtype=jnp.float32) * 0.01

    out2 = jax.block_until_ready(generator_forward(x2, w2, b2))
    assert out2.shape == (3, 5, v2)
    ref2 = _reference_bf16(x2, w2, b2)
    assert jnp.allclose(out2, ref2, atol=5e-3, rtol=5e-3), "mismatch vs reference (padded case)"
    assert jnp.allclose(jnp.sum(jnp.exp(out2), axis=-1), 1.0, atol=1e-3)

    print("KERNEL_OK")
</pallas_src>

<mosaic_0001>
module attributes {stable_mosaic.version = 11 : i64} {
  func.func @generator_kernel(%arg0: i32, %arg1: i32, %arg2: memref<16x32xbf16, #tpu.memory_space<vmem>>, %arg3: memref<32x128xbf16, #tpu.memory_space<vmem>>, %arg4: memref<1x128xf32, #tpu.memory_space<vmem>>, %arg5: memref<16x128xf32, #tpu.memory_space<vmem>>, %arg6: memref<16x1xf32, #tpu.memory_space<vmem>>, %arg7: memref<16x1xf32, #tpu.memory_space<vmem>>) attributes {dimension_semantics = [#tpu.dimension_semantics<parallel>, #tpu.dimension_semantics<arbitrary>], iteration_bounds = array<i64: 1, 2>, scalar_prefetch = 0 : i64, scratch_operands = 2 : i64, tpu.core_type = #tpu.core_type<tc>, window_params = [{transform_indices = @transform_0, window_bounds = array<i64: 16, 32>}, {transform_indices = @transform_1, window_bounds = array<i64: 32, 128>}, {transform_indices = @transform_2, window_bounds = array<i64: 1, 128>}, {transform_indices = @transform_3, window_bounds = array<i64: 16, 128>}]} {
    %c0 = arith.constant 0 : index
    %c0_0 = arith.constant 0 : index
    %0 = vector.load %arg2[%c0, %c0_0] : memref<16x32xbf16, #tpu.memory_space<vmem>>, vector<16x32xbf16>
    %c0_1 = arith.constant 0 : index
    %c0_2 = arith.constant 0 : index
    %1 = vector.load %arg3[%c0_1, %c0_2] : memref<32x128xbf16, #tpu.memory_space<vmem>>, vector<32x128xbf16>
    %cst = arith.constant dense<0.000000e+00> : vector<16x128xf32>
    %2 = tpu.matmul %0, %1, %cst {dimension_numbers = #tpu.dot_dimension_numbers<[1], [0], [0], [1], [0, 0, 1, 1], [], []>} : vector<16x32xbf16>, vector<32x128xbf16>, vector<16x128xf32> -> vector<16x128xf32>
    %c0_3 = arith.constant 0 : index
    %c0_4 = arith.constant 0 : index
    %3 = vector.load %arg4[%c0_3, %c0_4] : memref<1x128xf32, #tpu.memory_space<vmem>>, vector<1x128xf32>
    %4 = vector.broadcast %3 : vector<1x128xf32> to vector<16x128xf32>
    %5 = arith.addf %2, %4 : vector<16x128xf32>
    %c0_i32 = arith.constant 0 : i32
    %6 = arith.cmpi eq, %arg1, %c0_i32 : i32
    %7 = arith.extui %6 : i1 to i32
    %c0_i32_5 = arith.constant 0 : i32
    %8 = arith.cmpi ne, %7, %c0_i32_5 : i32
    scf.if %8 {
      %cst_11 = arith.constant 0xFF800000 : f32
      %18 = vector.broadcast %cst_11 : f32 to vector<16x1xf32>
      %c0_12 = arith.constant 0 : index
      %c0_13 = arith.constant 0 : index
      %19 = vector.load %arg6[%c0_12, %c0_13] : memref<16x1xf32, #tpu.memory_space<vmem>>, vector<16x1xf32>
      tpu.vector_store %arg6[%c0_12, %c0_13], %18 {strides = array<i32>} : memref<16x1xf32, #tpu.memory_space<vmem>>, vector<16x1xf32>,
      %cst_14 = arith.constant 0.000000e+00 : f32
      %20 = vector.broadcast %cst_14 : f32 to vector<16x1xf32>
      %c0_15 = arith.constant 0 : index
      %c0_16 = arith.constant 0 : index
      %21 = vector.load %arg7[%c0_15, %c0_16] : memref<16x1xf32, #tpu.memory_space<vmem>>, vector<16x1xf32>
      tpu.vector_store %arg7[%c0_15, %c0_16], %20 {strides = array<i32>} : memref<16x1xf32, #tpu.memory_space<vmem>>, vector<16x1xf32>,
    } else {
    }
    %c1_i32 = arith.constant 1 : i32
    %9 = arith.cmpi slt, %arg1, %c1_i32 : i32
    %10 = arith.extui %9 : i1 to i32
    %c0_i32_6 = arith.constant 0 : i32
    %11 = arith.cmpi ne, %10, %c0_i32_6 : i32
    scf.if %11 {
      %c0_11 = arith.constant 0 : index
      %c0_12 = arith.constant 0 : index
      %18 = vector.load %arg6[%c0_11, %c0_12] : memref<16x1xf32, #tpu.memory_space<vmem>>, vector<16x1xf32>
      %cst_13 = arith.constant dense<0xFF800000> : vector<16xf32>
      %19 = vector.multi_reduction <maximumf>, %5, %cst_13 [1] : vector<16x128xf32> to vector<16xf32>
      %20 = vector.shape_cast %19 : vector<16xf32> to vector<16x1xf32>
      %21 = arith.maximumf %18, %20 : vector<16x1xf32>
      %c0_14 = arith.constant 0 : index
      %c0_15 = arith.constant 0 : index
      %22 = vector.load %arg7[%c0_14, %c0_15] : memref<16x1xf32, #tpu.memory_space<vmem>>, vector<16x1xf32>
      %23 = arith.subf %18, %21 : vector<16x1xf32>
      %24 = math.exp %23 : vector<16x1xf32>
      %25 = arith.mulf %22, %24 : vector<16x1xf32>
      %26 = vector.broadcast %21 : vector<16x1xf32> to vector<16x128xf32>
      %27 = arith.subf %5, %26 : vector<16x128xf32>
      %28 = math.exp %27 : vector<16x128xf32>
      %cst_16 = arith.constant dense<0.000000e+00> : vector<16xf32>
      %29 = vector.multi_reduction <add>, %28, %cst_16 [1] : vector<16x128xf32> to vector<16xf32>
      %30 = vector.shape_cast %29 : vector<16xf32> to vector<16x1xf32>
      %31 = arith.addf %25, %30 : vector<16x1xf32>
      %c0_17 = arith.constant 0 : index
      %c0_18 = arith.constant 0 : index
      %32 = vector.load %arg7[%c0_17, %c0_18] : memref<16x1xf32, #tpu.memory_space<vmem>>, vector<16x1xf32>
      tpu.vector_store %arg7[%c0_17, %c0_18], %31 {strides = array<i32>} : memref<16x1xf32, #tpu.memory_space<vmem>>, vector<16x1xf32>,
      %c0_19 = arith.constant 0 : index
      %c0_20 = arith.constant 0 : index
      %33 = vector.load %arg6[%c0_19, %c0_20] : memref<16x1xf32, #tpu.memory_space<vmem>>, vector<16x1xf32>
      tpu.vector_store %arg6[%c0_19, %c0_20], %21 {strides = array<i32>} : memref<16x1xf32, #tpu.memory_space<vmem>>, vector<16x1xf32>,
    } else {
    }
    %c0_i32_7 = arith.constant 0 : i32
    %12 = arith.cmpi eq, %arg1, %c0_i32_7 : i32
    %13 = arith.extui %12 : i1 to i32
    %c0_i32_8 = arith.constant 0 : i32
    %14 = arith.cmpi ne, %13, %c0_i32_8 : i32
    scf.if %14 {
      %c0_11 = arith.constant 0 : index
      %c0_12 = arith.constant 0 : index
      %18 = vector.load %arg6[%c0_11, %c0_12] : memref<16x1xf32, #tpu.memory_space<vmem>>, vector<16x1xf32>
      %c0_13 = arith.constant 0 : index
      %c0_14 = arith.constant 0 : index
      %19 = vector.load %arg7[%c0_13, %c0_14] : memref<16x1xf32, #tpu.memory_space<vmem>>, vector<16x1xf32>
      %20 = math.log %19 : vector<16x1xf32>
      %21 = arith.addf %18, %20 : vector<16x1xf32>
      %c0_15 = arith.constant 0 : index
      %c0_16 = arith.constant 0 : index
      %22 = vector.load %arg6[%c0_15, %c0_16] : memref<16x1xf32, #tpu.memory_space<vmem>>, vector<16x1xf32>
      tpu.vector_store %arg6[%c0_15, %c0_16], %21 {strides = array<i32>} : memref<16x1xf32, #tpu.memory_space<vmem>>, vector<16x1xf32>,
    } else {
    }
    %c1_i32_9 = arith.constant 1 : i32
    %15 = arith.cmpi sge, %arg1, %c1_i32_9 : i32
    %16 = arith.extui %15 : i1 to i32
    %c0_i32_10 = arith.constant 0 : i32
    %17 = arith.cmpi ne, %16, %c0_i32_10 : i32
    scf.if %17 {
      %c0_11 = arith.constant 0 : index
      %c0_12 = arith.constant 0 : index
      %18 = vector.load %arg6[%c0_11, %c0_12] : memref<16x1xf32, #tpu.memory_space<vmem>>, vector<16x1xf32>
      %19 = vector.broadcast %18 : vector<16x1xf32> to vector<16x128xf32>
      %20 = arith.subf %5, %19 : vector<16x128xf32>
      %c0_13 = arith.constant 0 : index
      %c0_14 = arith.constant 0 : index
      %21 = vector.load %arg5[%c0_13, %c0_14] : memref<16x128xf32, #tpu.memory_space<vmem>>, vector<16x128xf32>
      tpu.vector_store %arg5[%c0_13, %c0_14], %20 {strides = array<i32>} : memref<16x128xf32, #tpu.memory_space<vmem>>, vector<16x128xf32>,
    } else {
    }
    return
  }
  func.func @transform_0(%arg0: i32, %arg1: i32) -> (i32, i32) {
    %c0_i32 = arith.constant 0 : i32
    %c0_i32_0 = arith.constant 0 : i32
    return %arg0, %c0_i32 : i32, i32
  }
  func.func @transform_1(%arg0: i32, %arg1: i32) -> (i32, i32) {
    %c1_i32 = arith.constant 1 : i32
    %c0_i32 = arith.constant 0 : i32
    %0 = arith.cmpi eq, %c1_i32, %c0_i32 : i32
    %c1_i32_0 = arith.constant 1 : i32
    %1 = arith.select %0, %c1_i32_0, %c1_i32 : i32
    %2 = arith.remsi %arg1, %1 : i32
    %c0_i32_1 = arith.constant 0 : i32
    %3 = arith.cmpi ne, %2, %c0_i32_1 : i32
    %c0_i32_2 = arith.constant 0 : i32
    %4 = arith.cmpi slt, %2, %c0_i32_2 : i32
    %c0_i32_3 = arith.constant 0 : i32
    %5 = arith.cmpi slt, %1, %c0_i32_3 : i32
    %6 = arith.xori %4, %5 : i1
    %7 = arith.andi %6, %3 : i1
    %8 = arith.addi %2, %1 : i32
    %9 = arith.select %7, %8, %2 : i32
    %c0_i32_4 = arith.constant 0 : i32
    %c0_i32_5 = arith.constant 0 : i32
    return %c0_i32_4, %9 : i32, i32
  }
  func.func @transform_2(%arg0: i32, %arg1: i32) -> (i32, i32) {
    %c1_i32 = arith.constant 1 : i32
    %c0_i32 = arith.constant 0 : i32
    %0 = arith.cmpi eq, %c1_i32, %c0_i32 : i32
    %c1_i32_0 = arith.constant 1 : i32
    %1 = arith.select %0, %c1_i32_0, %c1_i32 : i32
    %2 = arith.remsi %arg1, %1 : i32
    %c0_i32_1 = arith.constant 0 : i32
    %3 = arith.cmpi ne, %2, %c0_i32_1 : i32
    %c0_i32_2 = arith.constant 0 : i32
    %4 = arith.cmpi slt, %2, %c0_i32_2 : i32
    %c0_i32_3 = arith.constant 0 : i32
    %5 = arith.cmpi slt, %1, %c0_i32_3 : i32
    %6 = arith.xori %4, %5 : i1
    %7 = arith.andi %6, %3 : i1
    %8 = arith.addi %2, %1 : i32
    %9 = arith.select %7, %8, %2 : i32
    %c0_i32_4 = arith.constant 0 : i32
    %c0_i32_5 = arith.constant 0 : i32
    return %c0_i32_4, %9 : i32, i32
  }
  func.func @transform_3(%arg0: i32, %arg1: i32) -> (i32, i32) {
    %c1_i32 = arith.constant 1 : i32
    %0 = arith.subi %arg1, %c1_i32 : i32
    %c0_i32 = arith.constant 0 : i32
    %1 = arith.maxsi %0, %c0_i32 : i32
    %c0_i32_0 = arith.constant 0 : i32
    return %arg0, %1 : i32, i32
  }
}

</mosaic_0001>

<llo_original>
// kernel: tpu_custom_call.1
$region0: #{tpu_custom_call.1}
  #allocation0 [shape = 'u32[]', space=smem, size = 0x4, offset = 0x4, fixed_abs, tag = 'smem constant byte address 0x4 - core index']
  #allocation1 [shape = 'u32[144,128]{1,0:T(1,128)}', space=vmem, size = 0x12000, scoped, tag = 'internal scratch']
  #allocation2 [shape = 'f32[16,1]{1,0:T(8,128)}', space=vmem, size = 0x2000, scoped, tag = 'scratch operand']
  #allocation3 [shape = 'f32[16,1]{1,0:T(8,128)}', space=vmem, size = 0x2000, scoped, tag = 'scratch operand']
  %s0 = inlined_call_operand.hbm [shape: bf16[16,32], index: 0, kind: input, shape index: {}]
  %s1 = inlined_call_operand.hbm [shape: bf16[32,128], index: 1, kind: input, shape index: {}]
  %s2 = inlined_call_operand.vmem [shape: f32[1,128], index: 2, kind: input, shape index: {}]
  %s3 = inlined_call_operand.hbm [shape: f32[16,128], index: 3, kind: output, shape index: {}]
  %s4 = sld [smem:[#allocation0]]
  $region69: #{tpu_custom_call.1} parent=0
    _
  %s6 = ssub.s32 1, %s4
  %s7 = scalar_select 0, %s6, %s4
  $region1: #{tpu_custom_call.1} parent=0
    #allocation4 [shape = 'u8[4096]{0}', space=vmem, size = 0x1000, scoped, tag = 'input window, operand 0, single buffered']
    #allocation5 [shape = 's32[2]{0}', space=sflag, size = 0x8, scoped, tag = 'scoped memory for tpu_custom_call.1']
    #allocation6 [shape = 's32[2]{0}', space=sflag, size = 0x8, scoped, tag = 'scoped memory for tpu_custom_call.1']
    #allocation7 [shape = 'u8[8192]{0}', space=vmem, size = 0x2000, scoped, tag = 'input window, operand 1, single buffered']
    #allocation8 [shape = 's32[1]{0}', space=sflag, size = 0x4, scoped, tag = 'scoped memory for tpu_custom_call.1']
    #allocation9 [shape = 'u8[16384]{0}', space=vmem, size = 0x4000, scoped, tag = 'output window, operand 0']
    %8 = vsyncpa [#allocation5], 0
    %9 = vsyncpa [#allocation8], 0
    %10 = vsyncpa [#allocation6], 0
    %s11 = scalar_lea.sflag [#allocation6], 1
    %12 = vsyncpa %s11, 0
    loop: start=0, step=1, limit=4
    $region2: #{tpu_custom_call.1} parent=1 // loop_pre_header
      _
    $region3: #{tpu_custom_call.1} parent=1 // loop_header
      %s14 = sphi 0, %s18
      %p15 = scmp.ge.s32.totalorder %s14, 4
      %s21 = sphi 0, %s33
      %s22 = sphi 0, %s29
      %s23 = sphi 0, %s21
      %s24 = sphi 0, %s22
      %s25 = sphi 0, %s23
      %s26 = sphi 0, %s24
      %s36 = sphi 0, %s38
      %s39 = sphi 0, %s36
      %s40 = sphi 0, %s39
      %s56 = sphi 0, %s40
      %s60 = sphi 0, %s60
      %s62 = sphi 0, %s60
      %s63 = sphi 0, %s62
      %s77 = sphi 0, %s63
      %s81 = sphi 0, %s81
      %s83 = sphi 0, %s81
      %s84 = sphi 0, %s83
      %s98 = sphi 0, %s84
      %s112 = sphi 0, %s114
      %s115 = sphi 0, %s112
      %s116 = sphi 0, %s115
      %s132 = sphi 0, %s116
    $region4: #{tpu_custom_call.1} parent=1 // loop_header_branch
      %17 = sbr.rel (%p15) target = $region8
    $region5: #{tpu_custom_call.1} parent=1 // loop_body
      %s19 = ssub.s32 %s14, 1
      %s20 = ssub.s32 %s14, 2
      %s27 = sadd.s32 1, %s22
      %p28 = scmp.ge.s32.totalorder %s27, 2
      %s29 = scalar_select %p28, 0, %s27
      %s30 = sadd.s32 1, %s21
      %s31 = scalar_select %p28, %s30, %s21
      %p32 = scmp.ge.s32.totalorder %s31, 1
      %s33 = scalar_select %p32, 0, %s31
      %s34 = ssub.s32 %s21, %s33
      %p35 = scmp.eq.s32.totalorder %s34, 0
      %s37 = sadd.s32 %s36, 1
      %s38 = scalar_select %p35, %s36, %s37
      %p41 = pneg %p35
      %p42 = scmp.eq.s32.totalorder %s14, 1
      %p43 = por %p41, %p42
      %p44 = scmp.ne.s32.totalorder %s36, %s39
      %p45 = scmp.eq.s32.totalorder %s14, 0
      %p46 = por %p44, %p45
      %p47 = scmp.ne.s32.totalorder %s36, %s39
      %p48 = scmp.eq.s32.totalorder %s19, 1
      %p49 = por %p47, %p48
      %p50 = scmp.ne.s32.totalorder %s39, %s40
      %p51 = scmp.eq.s32.totalorder %s19, 0
      %p52 = por %p50, %p51
      %p53 = scmp.ne.s32.totalorder %s39, %s40
      %p54 = scmp.eq.s32.totalorder %s20, 1
      %p55 = por %p53, %p54
      %p57 = scmp.ne.s32.totalorder %s40, %s56
      %p58 = scmp.eq.s32.totalorder %s20, 0
      %p59 = por %p57, %p58
      %s61 = sadd.s32 %s60, 1
      %p64 = scmp.eq.s32.totalorder %s14, 1
      %p65 = scmp.ne.s32.totalorder %s60, %s62
      %p66 = scmp.eq.s32.totalorder %s14, 0
      %p67 = por %p65, %p66
      %p68 = scmp.ne.s32.totalorder %s60, %s62
      %p69 = scmp.eq.s32.totalorder %s19, 1
      %p70 = por %p68, %p69
      %p71 = scmp.ne.s32.totalorder %s62, %s63
      %p72 = scmp.eq.s32.totalorder %s19, 0
      %p73 = por %p71, %p72
      %p74 = scmp.ne.s32.totalorder %s62, %s63
      %p75 = scmp.eq.s32.totalorder %s20, 1
      %p76 = por %p74, %p75
      %p78 = scmp.ne.s32.totalorder %s63, %s77
      %p79 = scmp.eq.s32.totalorder %s20, 0
      %p80 = por %p78, %p79
      %s82 = sadd.s32 %s81, 1
      %p85 = scmp.eq.s32.totalorder %s14, 1
      %p86 = scmp.ne.s32.totalorder %s81, %s83
      %p87 = scmp.eq.s32.totalorder %s14, 0
      %p88 = por %p86, %p87
      %p89 = scmp.ne.s32.totalorder %s81, %s83
      %p90 = scmp.eq.s32.totalorder %s19, 1
      %p91 = por %p89, %p90
      %p92 = scmp.ne.s32.totalorder %s83, %s84
      %p93 = scmp.eq.s32.totalorder %s19, 0
      %p94 = por %p92, %p93
      %p95 = scmp.ne.s32.totalorder %s83, %s84
      %p96 = scmp.eq.s32.totalorder %s20, 1
      %p97 = por %p95, %p96
      %p99 = scmp.ne.s32.totalorder %s84, %s98
      %p100 = scmp.eq.s32.totalorder %s20, 0
      %p101 = por %p99, %p100
      %s102 = ssub.s32 %s22, 1
      %p103 = scmp.gt.s32.totalorder %s102, 0
      %s104 = scalar_select %p103, %s102, 0
      %s105 = ssub.s32 %s29, 1
      %p106 = scmp.gt.s32.totalorder %s105, 0
      %s107 = scalar_select %p106, %s105, 0
      %s108 = ssub.s32 %s21, %s33
      %s109 = ssub.s32 %s104, %s107
      %s110 = sor.u32 %s108, %s109
      %p111 = scmp.eq.s32.totalorder %s110, 0
      %s113 = sadd.s32 %s112, 1
      %s114 = scalar_select %p111, %s112, %s113
      %p117 = pneg %p111
      %p118 = scmp.eq.s32.totalorder %s14, 1
      %p119 = por %p117, %p118
      %p120 = scmp.ne.s32.totalorder %s112, %s115
      %p121 = scmp.eq.s32.totalorder %s14, 0
      %p122 = por %p120, %p121
      %p123 = scmp.ne.s32.totalorder %s112, %s115
      %p124 = scmp.eq.s32.totalorder %s19, 1
      %p125 = por %p123, %p124
      %p126 = scmp.ne.s32.totalorder %s115, %s116
      %p127 = scmp.eq.s32.totalorder %s19, 0
      %p128 = por %p126, %p127
      %p129 = scmp.ne.s32.totalorder %s115, %s116
      %p130 = scmp.eq.s32.totalorder %s20, 1
      %p131 = por %p129, %p130
      %p133 = scmp.ne.s32.totalorder %s116, %s132
      %p134 = scmp.eq.s32.totalorder %s20, 0
      %p135 = por %p133, %p134
      %p136 = scmp.le.s32.totalorder 1, %s14
      %p137 = scmp.lt.s32.totalorder %s14, 3
      %p138 = pnand %p136, %p137
      %p139 = pneg %p138
      // Predicated region
      $region9: #{tpu_custom_call.1} parent=5 // pred_check
        _
      $region10: #{tpu_custom_call.1} parent=5 // pred_check_branch
        %141 = sbr.rel (%p138) target = $region12
      $region11: #{tpu_custom_call.1} parent=5 // pred_region
        %s142 = ssub.s32 %s14, 1
        // Predicated region
        $region13: #{tpu_custom_call.1} parent=11 // pred_check
          %p143 = pneg %p52
        $region14: #{tpu_custom_call.1} parent=11 // pred_check_branch
          %145 = sbr.rel (%p143) target = $region16
        $region15: #{tpu_custom_call.1} parent=11 // pred_region
          %s146 = smul.u32 2, %s23
          %s148 = ssub.s32 128, 128
          %149 = vsyncadd [#allocation5], %s148
          %s150 = smul.addr %s146, 64
          %s151 = scalar_lea.hbm %s0, %s150
          %s152 = sshll.u32 [#allocation4], 4
          %s153 = int_to_ptr.vmem [resolvable:$true] %s152
          %158 = dma.hbm_to_vmem [thread:$0]  %s151, 128, %s153, [#allocation5], 64, 64, 4
        $region16: #{tpu_custom_call.1} parent=11 // pred_fallthru
          _
        // Predicated region
        $region17: #{tpu_custom_call.1} parent=11 // pred_check
          %p159 = pneg %p73
        $region18: #{tpu_custom_call.1} parent=11 // pred_check_branch
          %161 = sbr.rel (%p159) target = $region20
        $region19: #{tpu_custom_call.1} parent=11 // pred_region
          %s163 = ssub.s32 256, 256
          %164 = vsyncadd [#allocation8], %s163
          %s165 = sshll.u32 [#allocation7], 4
          %s166 = int_to_ptr.vmem [resolvable:$true] %s165
          %171 = dma.hbm_to_vmem [thread:$0]  %s1, 256, %s166, [#allocation8], 64, 64, 4
        $region20: #{tpu_custom_call.1} parent=11 // pred_fallthru
          _
        // Predicated region
        $region21: #{tpu_custom_call.1} parent=11 // pred_check
          %p172 = pneg %p94
        $region22: #{tpu_custom_call.1} parent=11 // pred_check_branch
          %174 = sbr.rel (%p172) target = $region24
        $region23: #{tpu_custom_call.1} parent=11 // pred_region
          _
        $region24: #{tpu_custom_call.1} parent=11 // pred_fallthru
          _
      $region12: #{tpu_custom_call.1} parent=5 // pred_fallthru
        _
      %p175 = scmp.lt.s32.totalorder %s14, 2
      // Predicated region
      $region25: #{tpu_custom_call.1} parent=5 // pred_check
        %p176 = pneg %p175
      $region26: #{tpu_custom_call.1} parent=5 // pred_check_branch
        %178 = sbr.rel (%p176) target = $region28
      $region27: #{tpu_custom_call.1} parent=5 // pred_region
        _
      $region28: #{tpu_custom_call.1} parent=5 // pred_fallthru
        _
      %p179 = scmp.le.s32.totalorder 1, %s14
      %p180 = scmp.lt.s32.totalorder %s14, 3
      %p181 = pnand %p179, %p180
      %p182 = pneg %p181
      // Predicated region
      $region29: #{tpu_custom_call.1} parent=5 // pred_check
        _
      $region30: #{tpu_custom_call.1} parent=5 // pred_check_branch
        %184 = sbr.rel (%p181) target = $region32
      $region31: #{tpu_custom_call.1} parent=5 // pred_region
        %s185 = ssub.s32 %s14, 1
        // Predicated region
        $region33: #{tpu_custom_call.1} parent=31 // pred_check
          %p186 = pneg %p52
        $region34: #{tpu_custom_call.1} parent=31 // pred_check_branch
          %188 = sbr.rel (%p186) target = $region36
        $region35: #{tpu_custom_call.1} parent=31 // pred_region
          %189 = dma.done [#allocation5], 128
        $region36: #{tpu_custom_call.1} parent=31 // pred_fallthru
          _
        // Predicated region
        $region37: #{tpu_custom_call.1} parent=31 // pred_check
          %p190 = pneg %p73
        $region38: #{tpu_custom_call.1} parent=31 // pred_check_branch
          %192 = sbr.rel (%p190) target = $region40
        $region39: #{tpu_custom_call.1} parent=31 // pred_region
          %193 = dma.done [#allocation8], 256
        $region40: #{tpu_custom_call.1} parent=31 // pred_fallthru
          _
        %p194 = pneg %p52
        %p195 = pneg %p49
        %p196 = pneg %p73
        %p197 = pneg %p70
        %p198 = pneg %p94
        %p199 = pneg %p91
        %p200 = pneg %p128
        %p201 = pneg %p125
        %s202 = sand.u32 %s115, 1
        %s203 = scalar_lea.sflag [#allocation6], %s202
        %s204 = sand.u32 %s115, 1
        %s205 = smul.addr %s204, 16
        %s206 = scalar_lea.vmem [#allocation9], %s205
        %s207 = smul.u32 2, %s23
        %s208 = ssub.s32 %s24, 1
        %p209 = scmp.gt.s32.totalorder %s208, 0
        %s210 = scalar_select %p209, %s208, 0
        %s211 = smul.u32 2, %s23
        %v213 = vld [vmem:[#allocation4] sm:$0xf]
        %v214 = vld [vmem:[#allocation4 + $0x4] sm:$0xf]
        %v215 = vld [vmem:[#allocation7] sm:$0xf]
        %v216 = vld [vmem:[#allocation7 + $0x4] sm:$0xf]
        %v217 = vld [vmem:[#allocation7 + $0x8] sm:$0xf]
        %v218 = vld [vmem:[#allocation7 + $0xc] sm:$0xf]
        %v219 = vld [vmem:[%s2] sm:$0x1]
        %v221 = vlaneseq
        %v222 = vshrl.u32 %v221, 7
        %v223 = vsub.s32 0, %v222
        %v224 = vrot.slane %v219, %v223
        %v228 = vunpack.c.l.b16 %v213
        %v229 = vunpack.c.l.b16 %v214
        %v230 = vpack.c.b16 %v229, %v228
        %v235 = vunpack.c.l.b16 %v215
        %v236 = vunpack.c.l.b16 %v216
        %v237 = vunpack.c.l.b16 %v217
        %v238 = vunpack.c.l.b16 %v218
        %v239 = vpack.c.b16 %v236, %v235
        %v240 = vpack.c.b16 %v238, %v237
        %vm243 = vcmask 261120
        %v245 = vsel %vm243, %v230, 0
        %247 = vmatprep.subr.bf16.mxu0 0
        %248 = vmatpush1.bf16.msra.mxu0 0
        %249 = vmatprep.subr.bf16.mxu0 0
        %250 = vmatpush1.bf16.msra.mxu0 0
        %251 = vmatprep.subr.bf16.mxu0 0
        %252 = vmatpush1.bf16.msra.mxu0 0
        %253 = vmatprep.subr.bf16.mxu0 0
        %254 = vmatpush1.bf16.msra.mxu0 0
        %255 = vmatprep.subr.bf16.mxu0 0
        %256 = vmatpush1.bf16.msra.mxu0 0
        %257 = vmatprep.subr.bf16.mxu0 0
        %258 = vmatpush1.bf16.msra.mxu0 0
        %259 = vmatprep.subr.bf16.mxu0 0
        %260 = vmatpush1.bf16.msra.mxu0 %v240
        %261 = vmatprep.subr.bf16.mxu0 0
        %262 = vmatpush1.bf16.msra.mxu0 %v239
        %263 = vmatprep.subr.bf16.mxu0 0
        %264 = vmatpush2.bf16.msra.mxu0 0
        %265 = vmatprep.subr.bf16.mxu0 0
        %266 = vmatpush2.bf16.msra.mxu0 0
        %267 = vmatprep.subr.bf16.mxu0 0
        %268 = vmatpush2.bf16.msra.mxu0 0
        %269 = vmatprep.subr.bf16.mxu0 0
        %270 = vmatpush2.bf16.msra.mxu0 0
        %271 = vmatprep.subr.bf16.mxu0 0
        %272 = vmatpush2.bf16.msra.mxu0 0
        %273 = vmatprep.subr.bf16.mxu0 0
        %274 = vmatpush2.bf16.msra.mxu0 0
        %275 = vmatprep.subr.bf16.mxu0 0
        %276 = vmatpush2.bf16.msra.mxu0 0
        %277 = vmatprep.subr.bf16.mxu0 0
        %278 = vmatpush2.bf16.msra.mxu0 0
        %279 = vmatprep.mubr.bf16.mxu0 0
        %280 = vmatmul.mubr.bf16.gmra.mxu0 %v245
        %v281 = vpop.f32.mrf.mxu0
        %v282 = vadd.f32 %v224, %v281
        %v283 = vpop.f32.mrf.mxu0
        %v284 = vpop.f32.mrf.mxu0
        %v285 = vadd.f32 %v224, %v284
        %v286 = vpop.f32.mrf.mxu0
        %287 = vdwg.mxu0
        %p288 = scmp.eq.s32.totalorder %s24, 0
        // Predicated region
        $region41: #{tpu_custom_call.1} parent=31 // pred_check
          %p289 = pneg %p288
        $region42: #{tpu_custom_call.1} parent=31 // pred_check_branch
          %291 = sbr.rel (%p289) target = $region44
        $region43: #{tpu_custom_call.1} parent=31 // pred_region
          %vm292 = vcmask 7168
          %293 = vst.msk [vmem:[#allocation2] sm:$0xff] %vm292, -inf
          %294 = vst.msk [vmem:[#allocation2 + $0x8] sm:$0xff] %vm292, -inf
          %295 = vst.msk [vmem:[#allocation3] sm:$0xff] %vm292, 0.0
          %296 = vst.msk [vmem:[#allocation3 + $0x8] sm:$0xff] %vm292, 0.0
        $region44: #{tpu_custom_call.1} parent=31 // pred_fallthru
          _
        %p297 = scmp.lt.s32.totalorder %s24, 1
        // Predicated region
        $region45: #{tpu_custom_call.1} parent=31 // pred_check
          %p298 = pneg %p297
        $region46: #{tpu_custom_call.1} parent=31 // pred_check_branch
          %300 = sbr.rel (%p298) target = $region48
        $region47: #{tpu_custom_call.1} parent=31 // pred_region
          %v301 = vld [vmem:[#allocation2] sm:$0xff]
          %v302 = vld [vmem:[#allocation2 + $0x8] sm:$0xff]
          %303 = vmax.xlane.f32.xlu0 %v282
          %v304 = vpop.xlane.xlu0 %303
          %305 = vmax.xlane.f32.xlu0 %v285
          %v306 = vpop.xlane.xlu0 %305
          %v307 = vmax.f32 %v301, %v304
          %v308 = vmax.f32 %v302, %v306
          %v309 = vld [vmem:[#allocation3] sm:$0xff]
          %v310 = vld [vmem:[#allocation3 + $0x8] sm:$0xff]
          %v311 = vsub.f32 %v301, %v307
          %v312 = vsub.f32 %v302, %v308
          %v313 = vmul.f32 %v311, 1.442695
          %v314 = vpow.pop %v313
          %v315 = vmul.f32 %v312, 1.442695
          %v316 = vpow.pop %v315
          %v317 = vmul.f32 %v309, %v314
          %v318 = vmul.f32 %v310, %v316
          %320 = vset.pattern.permute.xlu0 0
          %321 = vperm.xlu0 %320, %v307
          %v322 = vpop.permute.xlu0 %321
          %325 = vset.pattern.permute.xlu0 0
          %326 = vperm.xlu0 %325, %v308
          %v327 = vpop.permute.xlu0 %326
          %v329 = vsub.f32 %v282, %v322
          %v330 = vsub.f32 %v285, %v327
          %v331 = vmul.f32 %v329, 1.442695
          %v332 = vpow.pop %v331
          %v333 = vmul.f32 %v330, 1.442695
          %v334 = vpow.pop %v333
          %335 = vadd.xlane.f32.xlu0 %v332
          %v336 = vpop.xlane.xlu0 %335
          %337 = vadd.xlane.f32.xlu0 %v334
          %v338 = vpop.xlane.xlu0 %337
          %v339 = vadd.f32 %v317, %v336
          %v340 = vadd.f32 %v318, %v338
          %vm341 = vcmask 7168
          %342 = vst.msk [vmem:[#allocation3] sm:$0xff] %vm341, %v339
          %343 = vst.msk [vmem:[#allocation3 + $0x8] sm:$0xff] %vm341, %v340
          %344 = vst.msk [vmem:[#allocation2] sm:$0xff] %vm341, %v307
          %345 = vst.msk [vmem:[#allocation2 + $0x8] sm:$0xff] %vm341, %v308
        $region48: #{tpu_custom_call.1} parent=31 // pred_fallthru
          _
        // Predicated region
        $region49: #{tpu_custom_call.1} parent=31 // pred_check
          %p346 = pneg %p288
        $region50: #{tpu_custom_call.1} parent=31 // pred_check_branch
          %348 = sbr.rel (%p346) target = $region52
        $region51: #{tpu_custom_call.1} parent=31 // pred_region
          %v349 = vld [vmem:[#allocation2] sm:$0xff]
          %v350 = vld [vmem:[#allocation2 + $0x8] sm:$0xff]
          %v351 = vld [vmem:[#allocation3] sm:$0xff]
          %v352 = vld [vmem:[#allocation3 + $0x8] sm:$0xff]
          %v353 = vlog2.pop %v351
          %v354 = vmul.f32 %v353, 0.6931472
          %v355 = vlog2.pop %v352
          %v356 = vmul.f32 %v355, 0.6931472
          %v357 = vadd.f32 %v349, %v354
          %v358 = vadd.f32 %v350, %v356
          %vm359 = vcmask 7168
          %360 = vst.msk [vmem:[#allocation2] sm:$0xff] %vm359, %v357
          %361 = vst.msk [vmem:[#allocation2 + $0x8] sm:$0xff] %vm359, %v358
        $region52: #{tpu_custom_call.1} parent=31 // pred_fallthru
          _
        %p362 = scmp.ge.s32.totalorder %s24, 1
        // Predicated region
        $region53: #{tpu_custom_call.1} parent=31 // pred_check
          %p363 = pneg %p362
        $region54: #{tpu_custom_call.1} parent=31 // pred_check_branch
          %365 = sbr.rel (%p363) target = $region56
        $region55: #{tpu_custom_call.1} parent=31 // pred_region
          %v366 = vld [vmem:[#allocation2] sm:$0xff]
          %v367 = vld [vmem:[#allocation2 + $0x8] sm:$0xff]
          %369 = vset.pattern.permute.xlu0 0
          %370 = vperm.xlu0 %369, %v366
          %v371 = vpop.permute.xlu0 %370
          %374 = vset.pattern.permute.xlu0 0
          %375 = vperm.xlu0 %374, %v367
          %v376 = vpop.permute.xlu0 %375
          %v378 = vsub.f32 %v282, %v371
          %v379 = vsub.f32 %v285, %v376
          %380 = vst [vmem:[%s206] sm:$0xff] %v378
          %381 = vst [vmem:[%s206 + $0x8] sm:$0xff] %v379
        $region56: #{tpu_custom_call.1} parent=31 // pred_fallthru
          _
        %s382 = sand.u32 %s115, 1
        %s383 = scalar_lea.sflag [#allocation6], %s382
        %s384 = sand.u32 %s115, 1
        %s385 = smul.addr %s384, 16
        %s386 = scalar_lea.vmem [#allocation9], %s385
        // Predicated region
        $region57: #{tpu_custom_call.1} parent=31 // pred_check
          %p387 = pneg %p125
        $region58: #{tpu_custom_call.1} parent=31 // pred_check_branch
          %389 = sbr.rel (%p387) target = $region60
        $region59: #{tpu_custom_call.1} parent=31 // pred_region
          %s390 = ssub.s32 %s24, 1
          %p391 = scmp.gt.s32.totalorder %s390, 0
          %s392 = scalar_select %p391, %s390, 0
          %s393 = smul.u32 2, %s23
          %s395 = ssub.s32 256, 256
          %396 = vsyncadd %s383, %s395
          %s397 = sadd.s32 %s392, %s393
          %s398 = smul.addr %s397, 128
          %s399 = scalar_lea.hbm %s3, %s398
          %s400 = sshll.u32 %s386, 4
          %s401 = int_to_ptr.vmem [resolvable:$true] %s400
          %406 = dma.vmem_to_hbm [thread:$0]  %s401, 256, %s399, %s383, 128, 128, 8
        $region60: #{tpu_custom_call.1} parent=31 // pred_fallthru
          _
      $region32: #{tpu_custom_call.1} parent=5 // pred_fallthru
        _
      %p407 = scmp.le.s32.totalorder 2, %s14
      // Predicated region
      $region61: #{tpu_custom_call.1} parent=5 // pred_check
        %p408 = pneg %p407
      $region62: #{tpu_custom_call.1} parent=5 // pred_check_branch
        %410 = sbr.rel (%p408) target = $region64
      $region63: #{tpu_custom_call.1} parent=5 // pred_region
        %s411 = ssub.s32 %s14, 2
        // Predicated region
        $region65: #{tpu_custom_call.1} parent=63 // pred_check
          %p412 = pneg %p131
        $region66: #{tpu_custom_call.1} parent=63 // pred_check_branch
          %414 = sbr.rel (%p412) target = $region68
        $region67: #{tpu_custom_call.1} parent=63 // pred_region
          %s415 = sand.u32 %s116, 1
          %s416 = scalar_lea.sflag [#allocation6], %s415
          %s417 = sand.u32 %s116, 1
          %s418 = smul.addr %s417, 16
          %s419 = scalar_lea.vmem [#allocation9], %s418
          %420 = dma.done %s416, 256
        $region68: #{tpu_custom_call.1} parent=63 // pred_fallthru
          _
      $region64: #{tpu_custom_call.1} parent=5 // pred_fallthru
        _
    $region6: #{tpu_custom_call.1} parent=1 // loop_footer
      %s18 = sadd.s32 1, %s14
    $region7: #{tpu_custom_call.1} parent=1 // loop_footer_branch
      %13 = sbr.rel target = $region3
    $region8: #{tpu_custom_call.1} parent=1 // loop_exit
      _
    %421 = vsyncpa [#allocation5], 1
    %s422 = scalar_lea.sflag [#allocation5], 1
    %423 = vsyncpa %s422, 1
    %424 = vsyncpa [#allocation8], 1
    %425 = vsyncpa [#allocation6], 1
    %s426 = scalar_lea.sflag [#allocation6], 1
    %427 = vsyncpa %s426, 1

</llo_original>
